<compile_context>
chip_gen: v7x
topology: tpu7x:2x2x1
jax: 0.10.0
libtpu: 0.0.40
codegen_flags: <defaults>
</compile_context>

<pallas_src>
import jax
import jax.numpy as jnp
from jax.experimental import pallas as pl
from jax.experimental.pallas import tpu as pltpu


_LANE_CHUNK = 256  # column-chunk width inside a tile; keeps fc1's (64, chunk)
                   # intermediate at ~16 vregs so larger tiles don't spill.


def mlp_kernel(xt_ref, w1_ref, b1_ref, w2_ref, b2_ref, ot_ref):
    # xt:  (in, TB)      batch on lanes (lane-dense)
    # w1:  (hidden, in)  fc1 weight in PyTorch (out_features, in_features) layout
    # b1:  (hidden, 1)
    # w2:  (hidden, 1)   fc2 weight as a column (fc2.weight.T)
    # b2:  (1, 1)
    # ot:  (1, TB)       lane-dense output tile
    tile_b = ot_ref.shape[1]
    chunk = min(_LANE_CHUNK, tile_b)
    n_chunks = tile_b // chunk  # static; tile_b is a multiple of chunk by construction

    w1 = w1_ref[...]
    b1 = b1_ref[...]
    w2 = w2_ref[...]
    b2 = b2_ref[...]

    # Static, fully-unrolled chunk loop (<= 4 iterations) with constant offsets.
    for c in range(n_chunks):
        lo = c * chunk
        xc = xt_ref[:, lo:lo + chunk]                       # (in, chunk)
        # fc1: one small MXU pass, (hidden, in) @ (in, chunk) -> (hidden, chunk).
        h = jnp.dot(w1, xc, preferred_element_type=jnp.float32) + b1
        # fc2 (output=1): VPU multiply + sublane reduction (XLU), no 2nd MXU pass.
        logits = jnp.sum(h * w2, axis=0, keepdims=True) + b2
        # sigmoid: exp issues on the EUP slot; lane-dense store.
        ot_ref[:, lo:lo + chunk] = jax.nn.sigmoid(logits).astype(ot_ref.dtype)


def _pick_tile_b(padded_b, cap=1024):
    """Largest tile (multiple of 128, <= cap) dividing padded_b; prefer an even
    number (>= 2) of tiles when padded_b >= 256 so v7x megacore can shard."""
    m = padded_b // 128
    best = 128
    best_even = None
    for d in range(1, m + 1):
        t = 128 * d
        if t > cap:
            break
        if m % d:
            continue
        q = m // d  # number of grid steps
        if padded_b >= 256 and q < 2:
            continue  # keep >=2 tiles so the parallel axis can use both TCs (v7x)
        best = t
        if q % 2 == 0:
            best_even = t
    return best_even if best_even is not None else best


def mlleaks_mlp_forward(x, w1, b1, w2, b2):
    """x: (B, input_size); w1: (hidden, input_size); b1: (hidden, 1);
    w2: (hidden, 1); b2: (1, 1). Returns (B, 1) = sigmoid(fc2(fc1(x)))."""
    batch, in_dim = x.shape
    hidden = w1.shape[0]
    assert w2.shape == (hidden, 1), "kernel specialised to output=1 (module default)"

    # Pad batch to a multiple of 128 lanes only (<= 127 wasted columns), then
    # pick the largest tile that divides it.
    padded_b = 128 * pl.cdiv(batch, 128)
    tile_b = _pick_tile_b(padded_b)
    n_tiles = padded_b // tile_b

    # Lane-dense layout: batch on the last (lane) axis. The transpose+pad is the
    # only wrapper-side prep and is allowed to fuse into the pallas_call prologue
    # via allow_input_fusion (input 0).
    xt = jnp.pad(x.T, ((0, 0), (0, padded_b - batch)))

    out_t = pl.pallas_call(
        mlp_kernel,
        out_shape=jax.ShapeDtypeStruct((1, padded_b), jnp.float32),
        grid=(n_tiles,),
        in_specs=[
            pl.BlockSpec((in_dim, tile_b), lambda i: (0, i)),   # x tile (lane-dense)
            pl.BlockSpec(w1.shape, lambda i: (0, 0)),           # weights: full, resident
            pl.BlockSpec(b1.shape, lambda i: (0, 0)),
            pl.BlockSpec(w2.shape, lambda i: (0, 0)),
            pl.BlockSpec(b2.shape, lambda i: (0, 0)),
        ],
        out_specs=pl.BlockSpec((1, tile_b), lambda i: (0, i)),
        compiler_params=pltpu.CompilerParams(
            dimension_semantics=("parallel",),                  # shards across TCs on v7x
            allow_input_fusion=[True, False, False, False, False],
        ),
    )(xt, w1, b1, w2, b2)

    # Back to (B, 1), dropping the (<128-column) batch padding.
    return out_t[:, :batch].T


def init_params(key, input_size=3, hidden_size=64, output=1):
    # Deterministic init mimicking PyTorch nn.Linear default:
    # U(-1/sqrt(fan_in), 1/sqrt(fan_in)). Weights kept in the layout the kernel wants.
    assert output == 1
    k1, k2, k3, k4 = jax.random.split(key, 4)
    bound1 = 1.0 / jnp.sqrt(input_size)
    bound2 = 1.0 / jnp.sqrt(hidden_size)
    w1 = jax.random.uniform(k1, (hidden_size, input_size), jnp.float32, -bound1, bound1)
    b1 = jax.random.uniform(k2, (hidden_size, 1), jnp.float32, -bound1, bound1)
    w2 = jax.random.uniform(k3, (hidden_size, output), jnp.float32, -bound2, bound2)
    b2 = jax.random.uniform(k4, (1, output), jnp.float32, -bound2, bound2)
    return w1, b1, w2, b2


def _ref_forward(x, w1, b1, w2, b2):
    # Reference: the PyTorch forward in plain JAX (fc1 -> fc2 -> sigmoid).
    return jax.nn.sigmoid((x @ w1.T + b1.T) @ w2 + b2)


if __name__ == "__main__":
    key = jax.random.PRNGKey(0)
    kx, kx2, kp = jax.random.split(key, 3)

    input_size, hidden_size, output = 3, 64, 1
    w1, b1, w2, b2 = init_params(kp, input_size, hidden_size, output)

    # Small batch (single 128-lane tile, padded).
    batch = 8
    x = jax.random.normal(kx, (batch, input_size), jnp.float32)
    out = jax.block_until_ready(mlleaks_mlp_forward(x, w1, b1, w2, b2))
    ref = _ref_forward(x, w1, b1, w2, b2)
    assert out.shape == (batch, output)
    assert jnp.allclose(out, ref, atol=1e-5, rtol=1e-5)

    # Awkward batch size: exercises multi-tile grid, bounded padding and chunking.
    batch2 = 600
    x2 = jax.random.normal(kx2, (batch2, input_size), jnp.float32)
    out2 = jax.block_until_ready(mlleaks_mlp_forward(x2, w1, b1, w2, b2))
    ref2 = _ref_forward(x2, w1, b1, w2, b2)
    assert out2.shape == (batch2, output)
    assert jnp.allclose(out2, ref2, atol=1e-5, rtol=1e-5)

    print("KERNEL_OK")
</pallas_src>

<mosaic_0001>
module attributes {stable_mosaic.version = 11 : i64} {
  func.func @mlp_kernel(%arg0: i32, %arg1: memref<3x128xf32, #tpu.memory_space<vmem>>, %arg2: memref<64x3xf32, #tpu.memory_space<vmem>>, %arg3: memref<64x1xf32, #tpu.memory_space<vmem>>, %arg4: memref<64x1xf32, #tpu.memory_space<vmem>>, %arg5: memref<1x1xf32, #tpu.memory_space<vmem>>, %arg6: memref<1x128xf32, #tpu.memory_space<vmem>>) attributes {dimension_semantics = [#tpu.dimension_semantics<parallel>], iteration_bounds = array<i64: 1>, scalar_prefetch = 0 : i64, scratch_operands = 0 : i64, tpu.core_type = #tpu.core_type<tc>, window_params = [{transform_indices = @transform_0, window_bounds = array<i64: 3, 128>}, {pipeline_mode = #tpu.pipeline_mode<synchronous>, transform_indices = @transform_1, window_bounds = array<i64: 64, 3>}, {pipeline_mode = #tpu.pipeline_mode<synchronous>, transform_indices = @transform_2, window_bounds = array<i64: 64, 1>}, {pipeline_mode = #tpu.pipeline_mode<synchronous>, transform_indices = @transform_3, window_bounds = array<i64: 64, 1>}, {pipeline_mode = #tpu.pipeline_mode<synchronous>, transform_indices = @transform_4, window_bounds = array<i64: 1, 1>}, {transform_indices = @transform_5, window_bounds = array<i64: 1, 128>}]} {
    %c0 = arith.constant 0 : index
    %c0_0 = arith.constant 0 : index
    %0 = vector.load %arg2[%c0, %c0_0] : memref<64x3xf32, #tpu.memory_space<vmem>>, vector<64x3xf32>
    %c0_1 = arith.constant 0 : index
    %c0_2 = arith.constant 0 : index
    %1 = vector.load %arg3[%c0_1, %c0_2] : memref<64x1xf32, #tpu.memory_space<vmem>>, vector<64x1xf32>
    %c0_3 = arith.constant 0 : index
    %c0_4 = arith.constant 0 : index
    %2 = vector.load %arg4[%c0_3, %c0_4] : memref<64x1xf32, #tpu.memory_space<vmem>>, vector<64x1xf32>
    %c0_5 = arith.constant 0 : index
    %c0_6 = arith.constant 0 : index
    %3 = vector.load %arg5[%c0_5, %c0_6] : memref<1x1xf32, #tpu.memory_space<vmem>>, vector<1x1xf32>
    %c0_7 = arith.constant 0 : index
    %c0_8 = arith.constant 0 : index
    %4 = vector.load %arg1[%c0_7, %c0_8] : memref<3x128xf32, #tpu.memory_space<vmem>>, vector<3x128xf32>
    %cst = arith.constant dense<0.000000e+00> : vector<64x128xf32>
    %5 = tpu.matmul %0, %4, %cst {dimension_numbers = #tpu.dot_dimension_numbers<[1], [0], [0], [1], [0, 0, 1, 1], [], []>} : vector<64x3xf32>, vector<3x128xf32>, vector<64x128xf32> -> vector<64x128xf32>
    %6 = vector.broadcast %1 : vector<64x1xf32> to vector<64x128xf32>
    %7 = arith.addf %5, %6 : vector<64x128xf32>
    %8 = vector.broadcast %2 : vector<64x1xf32> to vector<64x128xf32>
    %9 = arith.mulf %7, %8 : vector<64x128xf32>
    %cst_9 = arith.constant dense<0.000000e+00> : vector<128xf32>
    %10 = vector.multi_reduction <add>, %9, %cst_9 [0] : vector<64x128xf32> to vector<128xf32>
    %11 = vector.shape_cast %10 : vector<128xf32> to vector<1x128xf32>
    %12 = vector.broadcast %3 : vector<1x1xf32> to vector<1x128xf32>
    %13 = arith.addf %11, %12 : vector<1x128xf32>
    %14 = arith.negf %13 : vector<1x128xf32>
    %15 = math.exp %14 : vector<1x128xf32>
    %cst_10 = arith.constant 1.000000e+00 : f32
    %16 = vector.broadcast %cst_10 : f32 to vector<1x128xf32>
    %17 = arith.addf %16, %15 : vector<1x128xf32>
    %18 = arith.divf %16, %17 : vector<1x128xf32>
    %c0_11 = arith.constant 0 : index
    %c0_12 = arith.constant 0 : index
    %19 = vector.load %arg6[%c0_11, %c0_12] : memref<1x128xf32, #tpu.memory_space<vmem>>, vector<1x128xf32>
    tpu.vector_store %arg6[%c0_11, %c0_12], %18 {strides = array<i32>} : memref<1x128xf32, #tpu.memory_space<vmem>>, vector<1x128xf32>,
    return
  }
  func.func @transform_0(%arg0: i32) -> (i32, i32) {
    %c0_i32 = arith.constant 0 : i32
    %c0_i32_0 = arith.constant 0 : i32
    return %c0_i32, %arg0 : i32, i32
  }
  func.func @transform_1(%arg0: i32) -> (i32, i32) {
    %c0_i32 = arith.constant 0 : i32
    %c0_i32_0 = arith.constant 0 : i32
    %c0_i32_1 = arith.constant 0 : i32
    return %c0_i32, %c0_i32_0 : i32, i32
  }
  func.func @transform_2(%arg0: i32) -> (i32, i32) {
    %c0_i32 = arith.constant 0 : i32
    %c0_i32_0 = arith.constant 0 : i32
    %c0_i32_1 = arith.constant 0 : i32
    return %c0_i32, %c0_i32_0 : i32, i32
  }
  func.func @transform_3(%arg0: i32) -> (i32, i32) {
    %c0_i32 = arith.constant 0 : i32
    %c0_i32_0 = arith.constant 0 : i32
    %c0_i32_1 = arith.constant 0 : i32
    return %c0_i32, %c0_i32_0 : i32, i32
  }
  func.func @transform_4(%arg0: i32) -> (i32, i32) {
    %c0_i32 = arith.constant 0 : i32
    %c0_i32_0 = arith.constant 0 : i32
    %c0_i32_1 = arith.constant 0 : i32
    return %c0_i32, %c0_i32_0 : i32, i32
  }
  func.func @transform_5(%arg0: i32) -> (i32, i32) {
    %c0_i32 = arith.constant 0 : i32
    %c0_i32_0 = arith.constant 0 : i32
    return %c0_i32, %arg0 : i32, i32
  }
}

</mosaic_0001>

<llo_original>
// kernel: tpu_custom_call.1
$region0: #{tpu_custom_call.1}
  #allocation0 [shape = 'u32[]', space=smem, size = 0x4, offset = 0x4, fixed_abs, tag = 'smem constant byte address 0x4 - core index']
  #allocation1 [shape = 'u32[144,128]{1,0:T(1,128)}', space=vmem, size = 0x12000, scoped, tag = 'internal scratch']
  #allocation2 [shape = 'f32[1,1]{1,0:T(1,128)S(1)}', space=vmem, size = 0x200, scoped, tag = 'scoped memory for tpu_custom_call.1']
  %s0 = inlined_call_operand.vmem [shape: f32[3,128], index: 0, kind: input, shape index: {}]
  %s1 = inlined_call_operand.vmem [shape: f32[64,3], index: 1, kind: input, shape index: {}]
  %s2 = inlined_call_operand.vmem [shape: f32[64,1], index: 2, kind: input, shape index: {}]
  %s3 = inlined_call_operand.vmem [shape: f32[64,1], index: 3, kind: input, shape index: {}]
  %s4 = inlined_call_operand.<no memory space> [shape: f32[1,1], index: 4, kind: input, shape index: {}]
  %s5 = inlined_call_operand.hbm [shape: f32[1,128], index: 5, kind: output, shape index: {}]
  %s6 = sld [smem:[#allocation0]]
  $region30: #{tpu_custom_call.1} parent=0
    _
  %s8 = ssub.s32 1, %s6
  %s9 = scalar_select 0, %s8, %s6
  %v10 = vstv %s4
  %11 = vst [vmem:[#allocation2] sm:$0x1] %v10
  $region1: #{tpu_custom_call.1} parent=0
    #allocation3 [shape = 'u8[512]{0}', space=vmem, size = 0x400, scoped, tag = 'output window, operand 0, single buffered']
    #allocation4 [shape = 's32[1]{0}', space=sflag, size = 0x4, scoped, tag = 'scoped memory for tpu_custom_call.1']
    %12 = vsyncpa [#allocation4], 0
    // Predicated region
    $region2: #{tpu_custom_call.1} parent=1 // pred_check
      _
    $region3: #{tpu_custom_call.1} parent=1 // pred_check_branch
      %14 = sbr.rel (0) target = $region5
    $region4: #{tpu_custom_call.1} parent=1 // pred_region
      _
    $region5: #{tpu_custom_call.1} parent=1 // pred_fallthru
      _
    // Predicated region
    $region6: #{tpu_custom_call.1} parent=1 // pred_check
      _
    $region7: #{tpu_custom_call.1} parent=1 // pred_check_branch
      %16 = sbr.rel (0) target = $region9
    $region8: #{tpu_custom_call.1} parent=1 // pred_region
      _
    $region9: #{tpu_custom_call.1} parent=1 // pred_fallthru
      _
    // Predicated region
    $region10: #{tpu_custom_call.1} parent=1 // pred_check
      _
    $region11: #{tpu_custom_call.1} parent=1 // pred_check_branch
      %18 = sbr.rel (0) target = $region13
    $region12: #{tpu_custom_call.1} parent=1 // pred_region
      _
    $region13: #{tpu_custom_call.1} parent=1 // pred_fallthru
      _
    // Predicated region
    $region14: #{tpu_custom_call.1} parent=1 // pred_check
      _
    $region15: #{tpu_custom_call.1} parent=1 // pred_check_branch
      %20 = sbr.rel (0) target = $region17
    $region16: #{tpu_custom_call.1} parent=1 // pred_region
      _
    $region17: #{tpu_custom_call.1} parent=1 // pred_fallthru
      _
    // Predicated region
    $region18: #{tpu_custom_call.1} parent=1 // pred_check
      _
    $region19: #{tpu_custom_call.1} parent=1 // pred_check_branch
      %22 = sbr.rel (0) target = $region21
    $region20: #{tpu_custom_call.1} parent=1 // pred_region
      _
    $region21: #{tpu_custom_call.1} parent=1 // pred_fallthru
      _
    %v23 = vld [vmem:[%s1] sm:$0xff]
    %v24 = vld [vmem:[%s1 + $0x8] sm:$0xff]
    %v25 = vld [vmem:[%s1 + $0x10] sm:$0xff]
    %v26 = vld [vmem:[%s1 + $0x18] sm:$0xff]
    %v27 = vld [vmem:[%s1 + $0x20] sm:$0xff]
    %v28 = vld [vmem:[%s1 + $0x28] sm:$0xff]
    %v29 = vld [vmem:[%s1 + $0x30] sm:$0xff]
    %v30 = vld [vmem:[%s1 + $0x38] sm:$0xff]
    %v31 = vld [vmem:[%s2] sm:$0xff]
    %v32 = vld [vmem:[%s2 + $0x8] sm:$0xff]
    %v33 = vld [vmem:[%s2 + $0x10] sm:$0xff]
    %v34 = vld [vmem:[%s2 + $0x18] sm:$0xff]
    %v35 = vld [vmem:[%s2 + $0x20] sm:$0xff]
    %v36 = vld [vmem:[%s2 + $0x28] sm:$0xff]
    %v37 = vld [vmem:[%s2 + $0x30] sm:$0xff]
    %v38 = vld [vmem:[%s2 + $0x38] sm:$0xff]
    %v39 = vld [vmem:[%s3] sm:$0xff]
    %v40 = vld [vmem:[%s3 + $0x8] sm:$0xff]
    %v41 = vld [vmem:[%s3 + $0x10] sm:$0xff]
    %v42 = vld [vmem:[%s3 + $0x18] sm:$0xff]
    %v43 = vld [vmem:[%s3 + $0x20] sm:$0xff]
    %v44 = vld [vmem:[%s3 + $0x28] sm:$0xff]
    %v45 = vld [vmem:[%s3 + $0x30] sm:$0xff]
    %v46 = vld [vmem:[%s3 + $0x38] sm:$0xff]
    %v47 = vld [vmem:[#allocation2] sm:$0x1]
    %v48 = vld [vmem:[%s0] sm:$0x7]
    %50 = vset.pattern.permute.xlu0 0
    %51 = vperm.xlu0 %50, %v31
    %v52 = vpop.permute.xlu0 %51
    %55 = vset.pattern.permute.xlu0 0
    %56 = vperm.xlu0 %55, %v32
    %v57 = vpop.permute.xlu0 %56
    %60 = vset.pattern.permute.xlu0 0
    %61 = vperm.xlu0 %60, %v33
    %v62 = vpop.permute.xlu0 %61
    %65 = vset.pattern.permute.xlu0 0
    %66 = vperm.xlu0 %65, %v34
    %v67 = vpop.permute.xlu0 %66
    %70 = vset.pattern.permute.xlu0 0
    %71 = vperm.xlu0 %70, %v35
    %v72 = vpop.permute.xlu0 %71
    %75 = vset.pattern.permute.xlu0 0
    %76 = vperm.xlu0 %75, %v36
    %v77 = vpop.permute.xlu0 %76
    %80 = vset.pattern.permute.xlu0 0
    %81 = vperm.xlu0 %80, %v37
    %v82 = vpop.permute.xlu0 %81
    %85 = vset.pattern.permute.xlu0 0
    %86 = vperm.xlu0 %85, %v38
    %v87 = vpop.permute.xlu0 %86
    %vm89 = vcmask 23552
    %v91 = vsel %vm89, %v23, 0
    %v94 = vsel %vm89, %v24, 0
    %v97 = vsel %vm89, %v25, 0
    %v100 = vsel %vm89, %v26, 0
    %v103 = vsel %vm89, %v27, 0
    %v106 = vsel %vm89, %v28, 0
    %v109 = vsel %vm89, %v29, 0
    %v112 = vsel %vm89, %v30, 0
    %vm114 = vcmask 1042432
    %v116 = vsel %vm114, %v48, 0
    %118 = vmatprep.subr.mxu0 0.0
    %119 = vmatpush1.msra.mxu0 %v116
    %120 = vmatprep.subr.mxu0 0.0
    %121 = vmatpush1.msra.mxu0 0.0
    %122 = vmatprep.subr.mxu0 0.0
    %123 = vmatpush1.msra.mxu0 0.0
    %124 = vmatprep.subr.mxu0 0.0
    %125 = vmatpush1.msra.mxu0 0.0
    %126 = vmatprep.subr.mxu0 0.0
    %127 = vmatpush1.msra.mxu0 0.0
    %128 = vmatprep.subr.mxu0 0.0
    %129 = vmatpush1.msra.mxu0 0.0
    %130 = vmatprep.subr.mxu0 0.0
    %131 = vmatpush1.msra.mxu0 0.0
    %132 = vmatprep.subr.mxu0 0.0
    %133 = vmatpush1.msra.mxu0 0.0
    %134 = vmatprep.subr.mxu0 0.0
    %135 = vmatpush1.msra.mxu0 0.0
    %136 = vmatprep.subr.mxu0 0.0
    %137 = vmatpush1.msra.mxu0 0.0
    %138 = vmatprep.subr.mxu0 0.0
    %139 = vmatpush1.msra.mxu0 0.0
    %140 = vmatprep.subr.mxu0 0.0
    %141 = vmatpush1.msra.mxu0 0.0
    %142 = vmatprep.subr.mxu0 0.0
    %143 = vmatpush1.msra.mxu0 0.0
    %144 = vmatprep.subr.mxu0 0.0
    %145 = vmatpush1.msra.mxu0 0.0
    %146 = vmatprep.subr.mxu0 0.0
    %147 = vmatpush1.msra.mxu0 0.0
    %148 = vmatprep.subr.mxu0 0.0
    %149 = vmatpush1.msra.mxu0 0.0
    %150 = vmatprep.subr.mxu0 0.0
    %151 = vmatpush1.msra.mxu0 0.0
    %152 = vmatprep.subr.mxu0 0.0
    %153 = vmatpush1.msra.mxu0 0.0
    %154 = vmatprep.subr.mxu0 0.0
    %155 = vmatpush1.msra.mxu0 0.0
    %156 = vmatprep.subr.mxu0 0.0
    %157 = vmatpush1.msra.mxu0 0.0
    %158 = vmatprep.subr.mxu0 0.0
    %159 = vmatpush1.msra.mxu0 0.0
    %160 = vmatprep.subr.mxu0 0.0
    %161 = vmatpush1.msra.mxu0 0.0
    %162 = vmatprep.subr.mxu0 0.0
    %163 = vmatpush1.msra.mxu0 0.0
    %164 = vmatprep.subr.mxu0 0.0
    %165 = vmatpush1.msra.mxu0 0.0
    %166 = vmatprep.subr.mxu0 0.0
    %167 = vmatpush1.msra.mxu0 0.0
    %168 = vmatprep.subr.mxu0 0.0
    %169 = vmatpush1.msra.mxu0 0.0
    %170 = vmatprep.subr.mxu0 0.0
    %171 = vmatpush1.msra.mxu0 0.0
    %172 = vmatprep.subr.mxu0 0.0
    %173 = vmatpush1.msra.mxu0 0.0
    %174 = vmatprep.subr.mxu0 0.0
    %175 = vmatpush1.msra.mxu0 0.0
    %176 = vmatprep.subr.mxu0 0.0
    %177 = vmatpush1.msra.mxu0 0.0
    %178 = vmatprep.subr.mxu0 0.0
    %179 = vmatpush1.msra.mxu0 0.0
    %180 = vmatprep.subr.mxu0 0.0
    %181 = vmatpush1.msra.mxu0 0.0
    %182 = vmatprep.mubr.f32.mxu0 0.0
    %183 = vmatmul.mubr.f32.gmra.mrb[0].mxu0 %v91
    %v184 = vpop.f32.mrb[0].mxu0
    %v185 = vadd.f32 %v52, %v184
    %v186 = vpop.f32.mrb[0].mxu0
    %187 = vmatprep.mubr.f32.mxu0 0.0
    %188 = vmatmul.mubr.f32.gmra.mrb[0].mxu0 %v94
    %v189 = vpop.f32.mrb[0].mxu0
    %v190 = vadd.f32 %v57, %v189
    %v191 = vpop.f32.mrb[0].mxu0
    %192 = vmatprep.mubr.f32.mxu0 0.0
    %193 = vmatmul.mubr.f32.gmra.mrb[0].mxu0 %v97
    %v194 = vpop.f32.mrb[0].mxu0
    %v195 = vadd.f32 %v62, %v194
    %v196 = vpop.f32.mrb[0].mxu0
    %197 = vmatprep.mubr.f32.mxu0 0.0
    %198 = vmatmul.mubr.f32.gmra.mrb[0].mxu0 %v100
    %v199 = vpop.f32.mrb[0].mxu0
    %v200 = vadd.f32 %v67, %v199
    %v201 = vpop.f32.mrb[0].mxu0
    %202 = vmatprep.mubr.f32.mxu0 0.0
    %203 = vmatmul.mubr.f32.gmra.mrb[0].mxu0 %v103
    %v204 = vpop.f32.mrb[0].mxu0
    %v205 = vadd.f32 %v72, %v204
    %v206 = vpop.f32.mrb[0].mxu0
    %207 = vmatprep.mubr.f32.mxu0 0.0
    %208 = vmatmul.mubr.f32.gmra.mrb[0].mxu0 %v106
    %v209 = vpop.f32.mrb[0].mxu0
    %v210 = vadd.f32 %v77, %v209
    %v211 = vpop.f32.mrb[0].mxu0
    %212 = vmatprep.mubr.f32.mxu0 0.0
    %213 = vmatmul.mubr.f32.gmra.mrb[0].mxu0 %v109
    %v214 = vpop.f32.mrb[0].mxu0
    %v215 = vadd.f32 %v82, %v214
    %v216 = vpop.f32.mrb[0].mxu0
    %217 = vmatprep.mubr.f32.mxu0 0.0
    %218 = vmatmul.mubr.f32.gmra.mrb[0].mxu0 %v112
    %v219 = vpop.f32.mrb[0].mxu0
    %v220 = vadd.f32 %v87, %v219
    %v221 = vpop.f32.mrb[0].mxu0
    %222 = vdwg.mxu0
    %224 = vset.pattern.permute.xlu0 0
    %225 = vperm.xlu0 %224, %v39
    %v226 = vpop.permute.xlu0 %225
    %229 = vset.pattern.permute.xlu0 0
    %230 = vperm.xlu0 %229, %v40
    %v231 = vpop.permute.xlu0 %230
    %234 = vset.pattern.permute.xlu0 0
    %235 = vperm.xlu0 %234, %v41
    %v236 = vpop.permute.xlu0 %235
    %239 = vset.pattern.permute.xlu0 0
    %240 = vperm.xlu0 %239, %v42
    %v241 = vpop.permute.xlu0 %240
    %244 = vset.pattern.permute.xlu0 0
    %245 = vperm.xlu0 %244, %v43
    %v246 = vpop.permute.xlu0 %245
    %249 = vset.pattern.permute.xlu0 0
    %250 = vperm.xlu0 %249, %v44
    %v251 = vpop.permute.xlu0 %250
    %254 = vset.pattern.permute.xlu0 0
    %255 = vperm.xlu0 %254, %v45
    %v256 = vpop.permute.xlu0 %255
    %259 = vset.pattern.permute.xlu0 0
    %260 = vperm.xlu0 %259, %v46
    %v261 = vpop.permute.xlu0 %260
    %v263 = vmul.f32 %v185, %v226
    %v264 = vmul.f32 %v190, %v231
    %v265 = vmul.f32 %v195, %v236
    %v266 = vmul.f32 %v200, %v241
    %v267 = vmul.f32 %v205, %v246
    %v268 = vmul.f32 %v210, %v251
    %v269 = vmul.f32 %v215, %v256
    %v270 = vmul.f32 %v220, %v261
    %v271 = vadd.f32 %v263, %v264
    %v272 = vadd.f32 %v271, %v265
    %v273 = vadd.f32 %v272, %v266
    %v274 = vadd.f32 %v273, %v267
    %v275 = vadd.f32 %v274, %v268
    %v276 = vadd.f32 %v275, %v269
    %v277 = vadd.f32 %v276, %v270
    %v278 = vrot.slane %v277, 4
    %v279 = vadd.f32 %v277, %v278
    %v280 = vrot.slane %v279, 2
    %v281 = vadd.f32 %v279, %v280
    %v282 = vrot.slane %v281, 1
    %v283 = vadd.f32 %v281, %v282
    %285 = vset.pattern.permute.xlu0 0
    %286 = vperm.xlu0 %285, %v47
    %v287 = vpop.permute.xlu0 %286
    %v289 = vlaneseq
    %v290 = vshrl.u32 %v289, 7
    %v291 = vsub.s32 0, %v290
    %v292 = vrot.slane %v287, %v291
    %v293 = vadd.f32 %v283, %v292
    %v294 = vxor.u32 %v293, 2147483648
    %v295 = vmul.f32 %v294, 1.442695
    %v296 = vpow.pop %v295
    %v297 = vadd.f32 %v296, 1.0
    %v298 = vrcp.pop %v297
    %v299 = vmul.f32 1.0, %v298
    %300 = vst [vmem:[#allocation3] sm:$0x1] %v299
    // Predicated region
    $region22: #{tpu_custom_call.1} parent=1 // pred_check
      _
    $region23: #{tpu_custom_call.1} parent=1 // pred_check_branch
      %302 = sbr.rel (0) target = $region25
    $region24: #{tpu_custom_call.1} parent=1 // pred_region
      %s304 = ssub.s32 16, 16
      %305 = vsyncadd [#allocation4], %s304
      %s307 = sshll.u32 [#allocation3], 4
      %s308 = int_to_ptr.vmem [resolvable:$true] %s307
      %310 = dma.vmem_to_hbm [thread:$0]  %s308, 16, %s5, [#allocation4]
    $region25: #{tpu_custom_call.1} parent=1 // pred_fallthru
      _
    // Predicated region
    $region26: #{tpu_custom_call.1} parent=1 // pred_check
      _
    $region27: #{tpu_custom_call.1} parent=1 // pred_check_branch
      %312 = sbr.rel (0) target = $region29
    $region28: #{tpu_custom_call.1} parent=1 // pred_region
      %313 = dma.done [#allocation4], 16
    $region29: #{tpu_custom_call.1} parent=1 // pred_fallthru
      _
    %314 = vsyncpa [#allocation4], 1

</llo_original>
